<compile_context>
chip_gen: v6e
topology: v6e:2x2x1
jax: 0.10.0
libtpu: 0.0.40
codegen_flags: <defaults>
</compile_context>

<pallas_src>
import functools

import jax
import jax.numpy as jnp
from jax.experimental import pallas as pl
from jax.experimental.pallas import tpu as pltpu


# ----------------------------------------------------------------------------
# Stencil definitions (match the PyTorch module's __init__)
# ----------------------------------------------------------------------------
def _make_stencil(s, D=1.0, type="9-point"):
    h = D / s
    if type == "9-point":
        pattern = ((1.0, 4.0, 1.0),
                   (4.0, -20.0, 4.0),
                   (1.0, 4.0, 1.0))
        scale = 1.0 / (6.0 * h ** 2)
        cut_size = 1
    elif type == "9-point-OP":
        pattern = ((1.0, 2.0, 1.0),
                   (2.0, -12.0, 2.0),
                   (1.0, 2.0, 1.0))
        scale = 1.0 / (4.0 * h ** 2)
        cut_size = 1
    elif type == "13-point":
        pattern = ((0.0, 0.0, -1.0, 0.0, 0.0),
                   (0.0, 3.0, 4.0, 3.0, 0.0),
                   (-1.0, 4.0, -24.0, 4.0, -1.0),
                   (0.0, 3.0, 4.0, 3.0, 0.0),
                   (0.0, 0.0, -1.0, 0.0, 0.0))
        scale = 1.0 / (6.0 * h ** 2)
        cut_size = 2
    else:
        raise ValueError(
            "Invalid laplacian type, choose from 9-point, 9-point-OP, 13-point")
    return pattern, scale, cut_size


# ----------------------------------------------------------------------------
# Shared stencil math on an f32 block (..., H_blk, W) -> (..., h_out, w_out)
# ----------------------------------------------------------------------------
def _stencil_f32(u, pattern, scale, h_out, w_out):
    k = len(pattern)
    c = k // 2
    # All supported stencils are left-right symmetric; the kernel relies on it.
    assert all(tuple(row) == tuple(row[::-1]) for row in pattern)

    def lane(j):
        return u[..., :, j:j + w_out]

    # Column-pair sums (one VALU add replaces two separately-scaled taps); the
    # individual lane-shifted operands die immediately (fewer live f32 temps).
    pair = {}
    for j in range(c):
        if any(pattern[di][j] != 0.0 for di in range(k)):
            pair[j] = lane(j) + lane(k - 1 - j)
    center = (lane(c)
              if any(pattern[di][c] != 0.0 for di in range(k)) else None)

    # Distinct row contributions with the global scale folded into the tap
    # coefficients; identical rows (top/bottom symmetry) are computed once.
    row_cache = {}

    def row(di):
        key = tuple(pattern[di])
        if key not in row_cache:
            r = None
            for j in range(c):
                coef = key[j]
                if coef == 0.0:
                    continue
                t = (coef * scale) * pair[j]
                r = t if r is None else r + t
            if key[c] != 0.0:
                t = (key[c] * scale) * center
                r = t if r is None else r + t
            row_cache[key] = r
        return row_cache[key]

    acc = None
    for di in range(k):
        if all(v == 0.0 for v in pattern[di]):
            continue
        contrib = row(di)[..., di:di + h_out, :]
        acc = contrib if acc is None else acc + contrib
    return acc


# ----------------------------------------------------------------------------
# Path 1: whole-plane blocks via BlockSpec pipelining
# ----------------------------------------------------------------------------
def _laplace_kernel_block(u_ref, o_ref, *, pattern, scale):
    h_out, w_out = o_ref.shape[-2], o_ref.shape[-1]
    u = u_ref[...].astype(jnp.float32)          # (pb, H, W), one upfront cast
    res = _stencil_f32(u, pattern, scale, h_out, w_out)
    o_ref[...] = res.astype(o_ref.dtype)


def _vmem_budget():
    # Generation-aware budgets: v5e/v6e have 128 MiB physical VMEM, v7x 64 MiB.
    try:
        vmem = int(pltpu.get_tpu_info().vmem_capacity_bytes)
    except Exception:
        vmem = 64 * 1024 * 1024
    if vmem >= 100 * 1024 * 1024:               # v5e / v6e
        return 96 * 1024 * 1024, 4 * 1024 * 1024
    return 48 * 1024 * 1024, 2 * 1024 * 1024    # v7x (and unknown, conservative)


def _choose_pb(p, plane_in_bytes, max_block_bytes, min_block_bytes=1 << 20):
    """Pick planes-per-block from the divisors of p (no tail padding)."""
    divisors = [d for d in range(1, p + 1) if p % d == 0]
    fitting = [d for d in divisors if d * plane_in_bytes <= max_block_bytes]
    if not fitting:
        return 1
    pb = fitting[-1]                            # largest block that fits VMEM
    # Prefer an even grid-step count (>=4, then >=2) if the block stays at or
    # above the ~1 MiB HBM-DMA sweet spot: feeds both v7x TensorCores without
    # giving up DMA efficiency.  Harmless on single-core v5e/v6e.
    for min_steps in (4, 2):
        for d in reversed(fitting):
            steps = p // d
            if (steps >= min_steps and steps % 2 == 0
                    and d * plane_in_bytes >= min_block_bytes):
                return d
    return pb


def _laplace_planes_blocked(planes, pattern, scale, cut, vmem_limit,
                            max_block_bytes):
    p, h, w = planes.shape
    h_out, w_out = h - 2 * cut, w - 2 * cut
    plane_in_bytes = h * w * planes.dtype.itemsize
    pb = _choose_pb(p, plane_in_bytes, max_block_bytes)
    grid = (p // pb,)
    kernel = functools.partial(_laplace_kernel_block, pattern=pattern,
                               scale=scale)
    return pl.pallas_call(
        kernel,
        out_shape=jax.ShapeDtypeStruct((p, h_out, w_out), planes.dtype),
        grid_spec=pltpu.PrefetchScalarGridSpec(
            num_scalar_prefetch=0,
            grid=grid,
            in_specs=[pl.BlockSpec((pb, h, w), lambda b: (b, 0, 0))],
            out_specs=pl.BlockSpec((pb, h_out, w_out), lambda b: (b, 0, 0)),
        ),
        compiler_params=pltpu.CompilerParams(
            dimension_semantics=("parallel",),
            vmem_limit_bytes=vmem_limit,
        ),
    )(planes)


# ----------------------------------------------------------------------------
# Path 2: H-tiled manual-DMA path for planes too large to hold whole in VMEM
# ----------------------------------------------------------------------------
def _laplace_kernel_tiled(u_hbm, o_hbm, ubuf, obuf, in_sem, out_sem, *,
                          pattern, scale, tile_h, cut, h_out, w_out,
                          num_tiles):
    th_in = tile_h + 2 * cut
    p = pl.program_id(0)

    def row_start(t):
        # Clamp the last (fixed-size) tile so it overlaps the previous one
        # instead of running past the end; overlapped rows are recomputed
        # with identical values (no padding, no dynamic DMA sizes).
        return jnp.minimum(t * tile_h, h_out - tile_h)

    def in_copy(t, slot):
        r0 = row_start(t)
        return pltpu.make_async_copy(
            u_hbm.at[pl.ds(p, 1), pl.ds(r0, th_in), :],
            ubuf.at[slot], in_sem.at[slot])

    def out_copy(t, slot):
        r0 = row_start(t)
        return pltpu.make_async_copy(
            obuf.at[slot],
            o_hbm.at[pl.ds(p, 1), pl.ds(r0, tile_h), :],
            out_sem.at[slot])

    # Prime the pipeline with tile 0.
    in_copy(0, 0).start()

    def body(t, carry):
        slot = t % 2
        in_copy(t, slot).wait()

        @pl.when(t + 1 < num_tiles)
        def _():
            in_copy(t + 1, 1 - slot).start()

        # The out-DMA that last used this slot (iteration t-2) must be done
        # before we overwrite obuf[slot].
        @pl.when(t >= 2)
        def _():
            out_copy(t - 2, slot).wait()

        u = ubuf[slot].astype(jnp.float32)                # (1, th_in, W)
        res = _stencil_f32(u, pattern, scale, tile_h, w_out)
        obuf[slot] = res.astype(obuf.dtype)
        out_copy(t, slot).start()
        return carry

    jax.lax.fori_loop(0, num_tiles, body, 0)

    # Drain the last (up to two) output DMAs.
    if num_tiles >= 2:
        out_copy(num_tiles - 2, (num_tiles - 2) % 2).wait()
    out_copy(num_tiles - 1, (num_tiles - 1) % 2).wait()


def _choose_tile_h(h_out, w, itemsize, max_block_bytes):
    row_bytes = max(1, w * itemsize)
    target = min(max_block_bytes, 2 * 1024 * 1024)   # ~1-2 MiB input tiles
    th = (target // row_bytes) // 8 * 8
    th = max(8, th)
    return max(1, min(th, h_out))


def _laplace_planes_tiled(planes, pattern, scale, cut, tile_h, vmem_limit):
    p, h, w = planes.shape
    h_out, w_out = h - 2 * cut, w - 2 * cut
    tile_h = max(1, min(tile_h, h_out))
    num_tiles = pl.cdiv(h_out, tile_h)
    kernel = functools.partial(
        _laplace_kernel_tiled, pattern=pattern, scale=scale, tile_h=tile_h,
        cut=cut, h_out=h_out, w_out=w_out, num_tiles=num_tiles)
    return pl.pallas_call(
        kernel,
        out_shape=jax.ShapeDtypeStruct((p, h_out, w_out), planes.dtype),
        grid_spec=pltpu.PrefetchScalarGridSpec(
            num_scalar_prefetch=0,
            grid=(p,),
            in_specs=[pl.BlockSpec(memory_space=pl.ANY)],
            out_specs=pl.BlockSpec(memory_space=pl.ANY),
            scratch_shapes=[
                pltpu.VMEM((2, 1, tile_h + 2 * cut, w), planes.dtype),
                pltpu.VMEM((2, 1, tile_h, w_out), planes.dtype),
                pltpu.SemaphoreType.DMA((2,)),
                pltpu.SemaphoreType.DMA((2,)),
            ]),
        compiler_params=pltpu.CompilerParams(
            dimension_semantics=("parallel",),
            vmem_limit_bytes=vmem_limit,
        ),
    )(planes)


# ----------------------------------------------------------------------------
# Dispatcher
# ----------------------------------------------------------------------------
def _laplace_planes(planes, pattern, scale, cut, *, tile_h_override=None):
    """planes: (P, H, W) -> (P, H-2c, W-2c) via Pallas."""
    p, h, w = planes.shape
    h_out, w_out = h - 2 * cut, w - 2 * cut
    if h_out <= 0 or w_out <= 0:
        raise ValueError(
            f"Spatial dims ({h}, {w}) too small for cut_size={cut}")
    vmem_limit, max_block_bytes = _vmem_budget()
    plane_in_bytes = h * w * planes.dtype.itemsize
    if tile_h_override is None and plane_in_bytes <= max_block_bytes:
        return _laplace_planes_blocked(planes, pattern, scale, cut,
                                       vmem_limit, max_block_bytes)
    tile_h = (tile_h_override if tile_h_override is not None else
              _choose_tile_h(h_out, w, planes.dtype.itemsize, max_block_bytes))
    return _laplace_planes_tiled(planes, pattern, scale, cut, tile_h,
                                 vmem_limit)


# ----------------------------------------------------------------------------
# Module-equivalent wrapper
# ----------------------------------------------------------------------------
class LaplacePallas:
    def __init__(self, s, D=1.0, type="9-point"):
        self.s = s
        self.D = D
        self.h = D / s
        self.type = type
        self.pattern, self.scale, self.cut_size = _make_stencil(s, D, type)
        k = len(self.pattern)
        # Full scaled weights (mirrors the torch module's self.laplace buffer).
        self.laplace = (jnp.array(self.pattern, jnp.float32)
                        * jnp.float32(self.scale)).reshape(1, 1, k, k)

    def __call__(self, u):
        if u.ndim == 3:
            u_input = u[:, None, :, :]          # (B, 1, H, W)
            squeeze_output = True
        elif u.ndim == 4:
            u_input = u
            squeeze_output = False
        else:
            raise ValueError(f"Expected 3D or 4D input tensor, got {u.ndim}D")

        b, c, h, w = u_input.shape
        planes = u_input.reshape(b * c, h, w)
        out_planes = _laplace_planes(planes, self.pattern, self.scale,
                                     self.cut_size)
        h_out = h - 2 * self.cut_size
        w_out = w - 2 * self.cut_size
        out = out_planes.reshape(b, c, h_out, w_out)
        if squeeze_output:
            out = out[:, 0, :, :]
        return out, self.cut_size


# ----------------------------------------------------------------------------
# Pure-JAX reference (per-plane conv; avoids the feature-count mismatch)
# ----------------------------------------------------------------------------
def _reference(u4, kern):
    b, c, h, w = u4.shape
    x = u4.reshape(b * c, 1, h, w).astype(jnp.float32)
    out = jax.lax.conv_general_dilated(
        x, kern.astype(jnp.float32),
        window_strides=(1, 1), padding="VALID",
        dimension_numbers=("NCHW", "OIHW", "NCHW"),
        precision=jax.lax.Precision.HIGHEST)
    return out.reshape(b, c, out.shape[2], out.shape[3])


if __name__ == "__main__":
    key = jax.random.PRNGKey(0)
    s = 16
    B, C, H, W = 2, 4, 16, 16
    u = jax.random.normal(key, (B, C, H, W), dtype=jnp.float32)

    # Whole-plane BlockSpec path (small planes), all stencil types.
    for typ in ("9-point", "9-point-OP", "13-point"):
        mod = LaplacePallas(s=s, D=1.0, type=typ)
        out, cut = mod(u)
        out = jax.block_until_ready(out)
        ref = _reference(u, mod.laplace)
        assert out.shape == (B, C, H - 2 * cut, W - 2 * cut), (typ, out.shape)
        assert jnp.allclose(out, ref, rtol=1e-4, atol=1e-2), typ

    # 3D-input path (squeeze behavior).
    mod = LaplacePallas(s=s, D=1.0, type="9-point")
    u3 = u[:, 0, :, :]
    out3, cut3 = mod(u3)
    out3 = jax.block_until_ready(out3)
    ref3 = _reference(u3[:, None], mod.laplace)[:, 0]
    assert cut3 == 1
    assert out3.shape == (B, H - 2, W - 2)
    assert jnp.allclose(out3, ref3, rtol=1e-4, atol=1e-2)

    # Exercise the H-tiled manual-DMA path (used automatically for planes too
    # large to double-buffer whole in VMEM) with forced small tiles, including
    # a ragged last tile that exercises the clamped-overlap handling.
    for typ, (ht, wt), th in (("9-point", (80, 144), 24),
                              ("13-point", (72, 160), 16)):
        modt = LaplacePallas(s=s, D=1.0, type=typ)
        ut = jax.random.normal(jax.random.PRNGKey(1), (1, 1, ht, wt),
                               dtype=jnp.float32)
        planes = ut.reshape(1, ht, wt)
        out_t = _laplace_planes(planes, modt.pattern, modt.scale,
                                modt.cut_size, tile_h_override=th)
        out_t = jax.block_until_ready(out_t)
        ref_t = _reference(ut, modt.laplace)[0, 0]
        cs = modt.cut_size
        assert out_t.shape == (1, ht - 2 * cs, wt - 2 * cs), (typ, out_t.shape)
        assert jnp.allclose(out_t[0], ref_t, rtol=1e-4, atol=1e-2), typ

    print("KERNEL_OK")
</pallas_src>

<mosaic_0001>
module attributes {stable_mosaic.version = 11 : i64} {
  func.func @_laplace_kernel_block(%arg0: i32, %arg1: memref<8x16x16xf32, #tpu.memory_space<vmem>>, %arg2: memref<8x14x14xf32, #tpu.memory_space<vmem>>) attributes {dimension_semantics = [#tpu.dimension_semantics<parallel>], iteration_bounds = array<i64: 1>, scalar_prefetch = 0 : i64, scratch_operands = 0 : i64, tpu.core_type = #tpu.core_type<tc>, window_params = [{transform_indices = @transform_0, window_bounds = array<i64: 8, 16, 16>}, {transform_indices = @transform_1, window_bounds = array<i64: 8, 14, 14>}]} {
    %c0 = arith.constant 0 : index
    %c0_0 = arith.constant 0 : index
    %c0_1 = arith.constant 0 : index
    %0 = vector.load %arg1[%c0, %c0_0, %c0_1] : memref<8x16x16xf32, #tpu.memory_space<vmem>>, vector<8x16x16xf32>
    %1 = vector.extract_strided_slice %0 {offsets = [0, 0, 0], sizes = [8, 16, 14], strides = [1, 1, 1]} : vector<8x16x16xf32> to vector<8x16x14xf32>
    %2 = vector.extract_strided_slice %0 {offsets = [0, 0, 2], sizes = [8, 16, 14], strides = [1, 1, 1]} : vector<8x16x16xf32> to vector<8x16x14xf32>
    %3 = arith.addf %1, %2 : vector<8x16x14xf32>
    %4 = vector.extract_strided_slice %0 {offsets = [0, 0, 1], sizes = [8, 16, 14], strides = [1, 1, 1]} : vector<8x16x16xf32> to vector<8x16x14xf32>
    %cst = arith.constant 42.6666679 : f32
    %5 = vector.broadcast %cst : f32 to vector<8x16x14xf32>
    %6 = arith.mulf %5, %3 : vector<8x16x14xf32>
    %cst_2 = arith.constant 170.666672 : f32
    %7 = vector.broadcast %cst_2 : f32 to vector<8x16x14xf32>
    %8 = arith.mulf %7, %4 : vector<8x16x14xf32>
    %9 = arith.addf %6, %8 : vector<8x16x14xf32>
    %10 = vector.extract_strided_slice %9 {offsets = [0, 0, 0], sizes = [8, 14, 14], strides = [1, 1, 1]} : vector<8x16x14xf32> to vector<8x14x14xf32>
    %cst_3 = arith.constant 170.666672 : f32
    %11 = vector.broadcast %cst_3 : f32 to vector<8x16x14xf32>
    %12 = arith.mulf %11, %3 : vector<8x16x14xf32>
    %cst_4 = arith.constant -853.333312 : f32
    %13 = vector.broadcast %cst_4 : f32 to vector<8x16x14xf32>
    %14 = arith.mulf %13, %4 : vector<8x16x14xf32>
    %15 = arith.addf %12, %14 : vector<8x16x14xf32>
    %16 = vector.extract_strided_slice %15 {offsets = [0, 1, 0], sizes = [8, 14, 14], strides = [1, 1, 1]} : vector<8x16x14xf32> to vector<8x14x14xf32>
    %17 = arith.addf %10, %16 : vector<8x14x14xf32>
    %18 = vector.extract_strided_slice %9 {offsets = [0, 2, 0], sizes = [8, 14, 14], strides = [1, 1, 1]} : vector<8x16x14xf32> to vector<8x14x14xf32>
    %19 = arith.addf %17, %18 : vector<8x14x14xf32>
    %c0_5 = arith.constant 0 : index
    %c0_6 = arith.constant 0 : index
    %c0_7 = arith.constant 0 : index
    %20 = vector.load %arg2[%c0_5, %c0_6, %c0_7] : memref<8x14x14xf32, #tpu.memory_space<vmem>>, vector<8x14x14xf32>
    tpu.vector_store %arg2[%c0_5, %c0_6, %c0_7], %19 {strides = array<i32>} : memref<8x14x14xf32, #tpu.memory_space<vmem>>, vector<8x14x14xf32>,
    return
  }
  func.func @transform_0(%arg0: i32) -> (i32, i32, i32) {
    %c0_i32 = arith.constant 0 : i32
    %c0_i32_0 = arith.constant 0 : i32
    %c0_i32_1 = arith.constant 0 : i32
    return %arg0, %c0_i32, %c0_i32_0 : i32, i32, i32
  }
  func.func @transform_1(%arg0: i32) -> (i32, i32, i32) {
    %c0_i32 = arith.constant 0 : i32
    %c0_i32_0 = arith.constant 0 : i32
    %c0_i32_1 = arith.constant 0 : i32
    return %arg0, %c0_i32, %c0_i32_0 : i32, i32, i32
  }
}

</mosaic_0001>

<llo_original>
// kernel: tpu_custom_call.1
$region0: #{tpu_custom_call.1}
  #allocation0 [shape = 'u32[]', space=smem, size = 0x4, offset = 0x4, fixed_abs, tag = 'smem constant byte address 0x4 - core index']
  #allocation1 [shape = 'u32[144,128]{1,0:T(1,128)}', space=vmem, size = 0x12000, scoped, tag = 'internal scratch']
  %s0 = inlined_call_operand.hbm [shape: f32[8,16,16], index: 0, kind: input, shape index: {}]
  %s1 = inlined_call_operand.vmem [shape: f32[8,14,14], index: 1, kind: output, shape index: {}]
  %s2 = sld [smem:[#allocation0]]
  $region18: #{tpu_custom_call.1} parent=0
    _
  %s4 = ssub.s32 1, %s2
  %s5 = scalar_select 0, %s4, %s2
  $region1: #{tpu_custom_call.1} parent=0
    #allocation2 [shape = 'u8[65536]{0}', space=vmem, size = 0x10000, scoped, tag = 'input window, operand 0, single buffered']
    #allocation3 [shape = 's32[1]{0}', space=sflag, size = 0x4, scoped, tag = 'scoped memory for tpu_custom_call.1']
    %6 = vsyncpa [#allocation3], 0
    // Predicated region
    $region2: #{tpu_custom_call.1} parent=1 // pred_check
      _
    $region3: #{tpu_custom_call.1} parent=1 // pred_check_branch
      %8 = sbr.rel (0) target = $region5
    $region4: #{tpu_custom_call.1} parent=1 // pred_region
      %s10 = ssub.s32 2048, 2048
      %11 = vsyncadd [#allocation3], %s10
      %s12 = sshll.u32 [#allocation2], 4
      %s13 = int_to_ptr.vmem [resolvable:$true] %s12
      %18 = dma.hbm_to_vmem [thread:$0]  %s0, 2048, %s13, [#allocation3], 128, 128, 8
    $region5: #{tpu_custom_call.1} parent=1 // pred_fallthru
      _
    // Predicated region
    $region6: #{tpu_custom_call.1} parent=1 // pred_check
      _
    $region7: #{tpu_custom_call.1} parent=1 // pred_check_branch
      %20 = sbr.rel (0) target = $region9
    $region8: #{tpu_custom_call.1} parent=1 // pred_region
      %21 = dma.done [#allocation3], 2048
    $region9: #{tpu_custom_call.1} parent=1 // pred_fallthru
      _
    %v22 = vld [vmem:[#allocation2] sm:$0xff]
    %v23 = vld [vmem:[#allocation2 + $0x8] sm:$0xff]
    %v24 = vld [vmem:[#allocation2 + $0x10] sm:$0xff]
    %v25 = vld [vmem:[#allocation2 + $0x18] sm:$0xff]
    %v26 = vld [vmem:[#allocation2 + $0x20] sm:$0xff]
    %v27 = vld [vmem:[#allocation2 + $0x28] sm:$0xff]
    %v28 = vld [vmem:[#allocation2 + $0x30] sm:$0xff]
    %v29 = vld [vmem:[#allocation2 + $0x38] sm:$0xff]
    %v30 = vld [vmem:[#allocation2 + $0x40] sm:$0xff]
    %v31 = vld [vmem:[#allocation2 + $0x48] sm:$0xff]
    %v32 = vld [vmem:[#allocation2 + $0x50] sm:$0xff]
    %v33 = vld [vmem:[#allocation2 + $0x58] sm:$0xff]
    %v34 = vld [vmem:[#allocation2 + $0x60] sm:$0xff]
    %v35 = vld [vmem:[#allocation2 + $0x68] sm:$0xff]
    %v36 = vld [vmem:[#allocation2 + $0x70] sm:$0xff]
    %v37 = vld [vmem:[#allocation2 + $0x78] sm:$0xff]
    %54 = vrot.lane.b32.xlu0 %v22, 126
    %v55 = vpop.permute.xlu0 %54
    %56 = vrot.lane.b32.xlu0 %v23, 126
    %v57 = vpop.permute.xlu0 %56
    %58 = vrot.lane.b32.xlu0 %v24, 126
    %v59 = vpop.permute.xlu0 %58
    %60 = vrot.lane.b32.xlu0 %v25, 126
    %v61 = vpop.permute.xlu0 %60
    %62 = vrot.lane.b32.xlu0 %v26, 126
    %v63 = vpop.permute.xlu0 %62
    %64 = vrot.lane.b32.xlu0 %v27, 126
    %v65 = vpop.permute.xlu0 %64
    %66 = vrot.lane.b32.xlu0 %v28, 126
    %v67 = vpop.permute.xlu0 %66
    %68 = vrot.lane.b32.xlu0 %v29, 126
    %v69 = vpop.permute.xlu0 %68
    %70 = vrot.lane.b32.xlu0 %v30, 126
    %v71 = vpop.permute.xlu0 %70
    %72 = vrot.lane.b32.xlu0 %v31, 126
    %v73 = vpop.permute.xlu0 %72
    %74 = vrot.lane.b32.xlu0 %v32, 126
    %v75 = vpop.permute.xlu0 %74
    %76 = vrot.lane.b32.xlu0 %v33, 126
    %v77 = vpop.permute.xlu0 %76
    %78 = vrot.lane.b32.xlu0 %v34, 126
    %v79 = vpop.permute.xlu0 %78
    %80 = vrot.lane.b32.xlu0 %v35, 126
    %v81 = vpop.permute.xlu0 %80
    %82 = vrot.lane.b32.xlu0 %v36, 126
    %v83 = vpop.permute.xlu0 %82
    %84 = vrot.lane.b32.xlu0 %v37, 126
    %v85 = vpop.permute.xlu0 %84
    %v102 = vadd.f32 %v22, %v55
    %v103 = vadd.f32 %v23, %v57
    %v104 = vadd.f32 %v24, %v59
    %v105 = vadd.f32 %v25, %v61
    %v106 = vadd.f32 %v26, %v63
    %v107 = vadd.f32 %v27, %v65
    %v108 = vadd.f32 %v28, %v67
    %v109 = vadd.f32 %v29, %v69
    %v110 = vadd.f32 %v30, %v71
    %v111 = vadd.f32 %v31, %v73
    %v112 = vadd.f32 %v32, %v75
    %v113 = vadd.f32 %v33, %v77
    %v114 = vadd.f32 %v34, %v79
    %v115 = vadd.f32 %v35, %v81
    %v116 = vadd.f32 %v36, %v83
    %v117 = vadd.f32 %v37, %v85
    %v118 = vmul.f32 %v102, 42.666668
    %v119 = vmul.f32 %v103, 42.666668
    %v120 = vmul.f32 %v104, 42.666668
    %v121 = vmul.f32 %v105, 42.666668
    %v122 = vmul.f32 %v106, 42.666668
    %v123 = vmul.f32 %v107, 42.666668
    %v124 = vmul.f32 %v108, 42.666668
    %v125 = vmul.f32 %v109, 42.666668
    %v126 = vmul.f32 %v110, 42.666668
    %v127 = vmul.f32 %v111, 42.666668
    %v128 = vmul.f32 %v112, 42.666668
    %v129 = vmul.f32 %v113, 42.666668
    %v130 = vmul.f32 %v114, 42.666668
    %v131 = vmul.f32 %v115, 42.666668
    %v132 = vmul.f32 %v116, 42.666668
    %v133 = vmul.f32 %v117, 42.666668
    %v134 = vmul.f32 %v22, 170.66667
    %v135 = vmul.f32 %v23, 170.66667
    %v136 = vmul.f32 %v24, 170.66667
    %v137 = vmul.f32 %v25, 170.66667
    %v138 = vmul.f32 %v26, 170.66667
    %v139 = vmul.f32 %v27, 170.66667
    %v140 = vmul.f32 %v28, 170.66667
    %v141 = vmul.f32 %v29, 170.66667
    %v142 = vmul.f32 %v30, 170.66667
    %v143 = vmul.f32 %v31, 170.66667
    %v144 = vmul.f32 %v32, 170.66667
    %v145 = vmul.f32 %v33, 170.66667
    %v146 = vmul.f32 %v34, 170.66667
    %v147 = vmul.f32 %v35, 170.66667
    %v148 = vmul.f32 %v36, 170.66667
    %v149 = vmul.f32 %v37, 170.66667
    %166 = vrot.lane.b32.xlu0 %v134, 127
    %v167 = vpop.permute.xlu0 %166
    %168 = vrot.lane.b32.xlu0 %v135, 127
    %v169 = vpop.permute.xlu0 %168
    %170 = vrot.lane.b32.xlu0 %v136, 127
    %v171 = vpop.permute.xlu0 %170
    %172 = vrot.lane.b32.xlu0 %v137, 127
    %v173 = vpop.permute.xlu0 %172
    %174 = vrot.lane.b32.xlu0 %v138, 127
    %v175 = vpop.permute.xlu0 %174
    %176 = vrot.lane.b32.xlu0 %v139, 127
    %v177 = vpop.permute.xlu0 %176
    %178 = vrot.lane.b32.xlu0 %v140, 127
    %v179 = vpop.permute.xlu0 %178
    %180 = vrot.lane.b32.xlu0 %v141, 127
    %v181 = vpop.permute.xlu0 %180
    %182 = vrot.lane.b32.xlu0 %v142, 127
    %v183 = vpop.permute.xlu0 %182
    %184 = vrot.lane.b32.xlu0 %v143, 127
    %v185 = vpop.permute.xlu0 %184
    %186 = vrot.lane.b32.xlu0 %v144, 127
    %v187 = vpop.permute.xlu0 %186
    %188 = vrot.lane.b32.xlu0 %v145, 127
    %v189 = vpop.permute.xlu0 %188
    %190 = vrot.lane.b32.xlu0 %v146, 127
    %v191 = vpop.permute.xlu0 %190
    %192 = vrot.lane.b32.xlu0 %v147, 127
    %v193 = vpop.permute.xlu0 %192
    %194 = vrot.lane.b32.xlu0 %v148, 127
    %v195 = vpop.permute.xlu0 %194
    %196 = vrot.lane.b32.xlu0 %v149, 127
    %v197 = vpop.permute.xlu0 %196
    %v214 = vadd.f32 %v118, %v167
    %v215 = vadd.f32 %v119, %v169
    %v216 = vadd.f32 %v120, %v171
    %v217 = vadd.f32 %v121, %v173
    %v218 = vadd.f32 %v122, %v175
    %v219 = vadd.f32 %v123, %v177
    %v220 = vadd.f32 %v124, %v179
    %v221 = vadd.f32 %v125, %v181
    %v222 = vadd.f32 %v126, %v183
    %v223 = vadd.f32 %v127, %v185
    %v224 = vadd.f32 %v128, %v187
    %v225 = vadd.f32 %v129, %v189
    %v226 = vadd.f32 %v130, %v191
    %v227 = vadd.f32 %v131, %v193
    %v228 = vadd.f32 %v132, %v195
    %v229 = vadd.f32 %v133, %v197
    %v230 = vmul.f32 %v102, 170.66667
    %v231 = vmul.f32 %v103, 170.66667
    %v232 = vmul.f32 %v104, 170.66667
    %v233 = vmul.f32 %v105, 170.66667
    %v234 = vmul.f32 %v106, 170.66667
    %v235 = vmul.f32 %v107, 170.66667
    %v236 = vmul.f32 %v108, 170.66667
    %v237 = vmul.f32 %v109, 170.66667
    %v238 = vmul.f32 %v110, 170.66667
    %v239 = vmul.f32 %v111, 170.66667
    %v240 = vmul.f32 %v112, 170.66667
    %v241 = vmul.f32 %v113, 170.66667
    %v242 = vmul.f32 %v114, 170.66667
    %v243 = vmul.f32 %v115, 170.66667
    %v244 = vmul.f32 %v116, 170.66667
    %v245 = vmul.f32 %v117, 170.66667
    %v246 = vmul.f32 %v22, -853.3333
    %v247 = vmul.f32 %v23, -853.3333
    %v248 = vmul.f32 %v24, -853.3333
    %v249 = vmul.f32 %v25, -853.3333
    %v250 = vmul.f32 %v26, -853.3333
    %v251 = vmul.f32 %v27, -853.3333
    %v252 = vmul.f32 %v28, -853.3333
    %v253 = vmul.f32 %v29, -853.3333
    %v254 = vmul.f32 %v30, -853.3333
    %v255 = vmul.f32 %v31, -853.3333
    %v256 = vmul.f32 %v32, -853.3333
    %v257 = vmul.f32 %v33, -853.3333
    %v258 = vmul.f32 %v34, -853.3333
    %v259 = vmul.f32 %v35, -853.3333
    %v260 = vmul.f32 %v36, -853.3333
    %v261 = vmul.f32 %v37, -853.3333
    %278 = vrot.lane.b32.xlu0 %v246, 127
    %v279 = vpop.permute.xlu0 %278
    %280 = vrot.lane.b32.xlu0 %v247, 127
    %v281 = vpop.permute.xlu0 %280
    %282 = vrot.lane.b32.xlu0 %v248, 127
    %v283 = vpop.permute.xlu0 %282
    %284 = vrot.lane.b32.xlu0 %v249, 127
    %v285 = vpop.permute.xlu0 %284
    %286 = vrot.lane.b32.xlu0 %v250, 127
    %v287 = vpop.permute.xlu0 %286
    %288 = vrot.lane.b32.xlu0 %v251, 127
    %v289 = vpop.permute.xlu0 %288
    %290 = vrot.lane.b32.xlu0 %v252, 127
    %v291 = vpop.permute.xlu0 %290
    %292 = vrot.lane.b32.xlu0 %v253, 127
    %v293 = vpop.permute.xlu0 %292
    %294 = vrot.lane.b32.xlu0 %v254, 127
    %v295 = vpop.permute.xlu0 %294
    %296 = vrot.lane.b32.xlu0 %v255, 127
    %v297 = vpop.permute.xlu0 %296
    %298 = vrot.lane.b32.xlu0 %v256, 127
    %v299 = vpop.permute.xlu0 %298
    %300 = vrot.lane.b32.xlu0 %v257, 127
    %v301 = vpop.permute.xlu0 %300
    %302 = vrot.lane.b32.xlu0 %v258, 127
    %v303 = vpop.permute.xlu0 %302
    %304 = vrot.lane.b32.xlu0 %v259, 127
    %v305 = vpop.permute.xlu0 %304
    %306 = vrot.lane.b32.xlu0 %v260, 127
    %v307 = vpop.permute.xlu0 %306
    %308 = vrot.lane.b32.xlu0 %v261, 127
    %v309 = vpop.permute.xlu0 %308
    %v326 = vadd.f32 %v230, %v279
    %v327 = vadd.f32 %v231, %v281
    %v328 = vadd.f32 %v232, %v283
    %v329 = vadd.f32 %v233, %v285
    %v330 = vadd.f32 %v234, %v287
    %v331 = vadd.f32 %v235, %v289
    %v332 = vadd.f32 %v236, %v291
    %v333 = vadd.f32 %v237, %v293
    %v334 = vadd.f32 %v238, %v295
    %v335 = vadd.f32 %v239, %v297
    %v336 = vadd.f32 %v240, %v299
    %v337 = vadd.f32 %v241, %v301
    %v338 = vadd.f32 %v242, %v303
    %v339 = vadd.f32 %v243, %v305
    %v340 = vadd.f32 %v244, %v307
    %v341 = vadd.f32 %v245, %v309
    %vm358 = vcmask 1046528
    %v359 = vrot.slane %v326, 1
    %v360 = vrot.slane %v327, 1
    %v361 = vsel %vm358, %v359, %v360
    %v362 = vrot.slane %v328, 1
    %v363 = vrot.slane %v329, 1
    %v364 = vsel %vm358, %v362, %v363
    %v365 = vrot.slane %v330, 1
    %v366 = vrot.slane %v331, 1
    %v367 = vsel %vm358, %v365, %v366
    %v368 = vrot.slane %v332, 1
    %v369 = vrot.slane %v333, 1
    %v370 = vsel %vm358, %v368, %v369
    %v371 = vrot.slane %v334, 1
    %v372 = vrot.slane %v335, 1
    %v373 = vsel %vm358, %v371, %v372
    %v374 = vrot.slane %v336, 1
    %v375 = vrot.slane %v337, 1
    %v376 = vsel %vm358, %v374, %v375
    %v377 = vrot.slane %v338, 1
    %v378 = vrot.slane %v339, 1
    %v379 = vsel %vm358, %v377, %v378
    %v380 = vrot.slane %v340, 1
    %v381 = vrot.slane %v341, 1
    %v382 = vsel %vm358, %v380, %v381
    %v399 = vadd.f32 %v214, %v361
    %v400 = vadd.f32 %v215, %v360
    %v401 = vadd.f32 %v216, %v364
    %v402 = vadd.f32 %v217, %v363
    %v403 = vadd.f32 %v218, %v367
    %v404 = vadd.f32 %v219, %v366
    %v405 = vadd.f32 %v220, %v370
    %v406 = vadd.f32 %v221, %v369
    %v407 = vadd.f32 %v222, %v373
    %v408 = vadd.f32 %v223, %v372
    %v409 = vadd.f32 %v224, %v376
    %v410 = vadd.f32 %v225, %v375
    %v411 = vadd.f32 %v226, %v379
    %v412 = vadd.f32 %v227, %v378
    %v413 = vadd.f32 %v228, %v382
    %v414 = vadd.f32 %v229, %v381
    %vm431 = vcmask 1045504
    %v432 = vrot.slane %v214, 2
    %v433 = vrot.slane %v215, 2
    %v434 = vsel %vm431, %v432, %v433
    %v435 = vrot.slane %v216, 2
    %v436 = vrot.slane %v217, 2
    %v437 = vsel %vm431, %v435, %v436
    %v438 = vrot.slane %v218, 2
    %v439 = vrot.slane %v219, 2
    %v440 = vsel %vm431, %v438, %v439
    %v441 = vrot.slane %v220, 2
    %v442 = vrot.slane %v221, 2
    %v443 = vsel %vm431, %v441, %v442
    %v444 = vrot.slane %v222, 2
    %v445 = vrot.slane %v223, 2
    %v446 = vsel %vm431, %v444, %v445
    %v447 = vrot.slane %v224, 2
    %v448 = vrot.slane %v225, 2
    %v449 = vsel %vm431, %v447, %v448
    %v450 = vrot.slane %v226, 2
    %v451 = vrot.slane %v227, 2
    %v452 = vsel %vm431, %v450, %v451
    %v453 = vrot.slane %v228, 2
    %v454 = vrot.slane %v229, 2
    %v455 = vsel %vm431, %v453, %v454
    %v472 = vadd.f32 %v399, %v434
    %v473 = vadd.f32 %v400, %v433
    %v474 = vadd.f32 %v401, %v437
    %v475 = vadd.f32 %v402, %v436
    %v476 = vadd.f32 %v403, %v440
    %v477 = vadd.f32 %v404, %v439
    %v478 = vadd.f32 %v405, %v443
    %v479 = vadd.f32 %v406, %v442
    %v480 = vadd.f32 %v407, %v446
    %v481 = vadd.f32 %v408, %v445
    %v482 = vadd.f32 %v409, %v449
    %v483 = vadd.f32 %v410, %v448
    %v484 = vadd.f32 %v411, %v452
    %v485 = vadd.f32 %v412, %v451
    %v486 = vadd.f32 %v413, %v455
    %v487 = vadd.f32 %v414, %v454
    %vm488 = vcmask 113664
    %489 = vst.msk [vmem:[%s1] sm:$0xff] %vm488, %v472
    %vm490 = vcmask 111616
    %491 = vst.msk [vmem:[%s1 + $0x8] sm:$0x3f] %vm490, %v473
    %492 = vst.msk [vmem:[%s1 + $0x10] sm:$0xff] %vm488, %v474
    %493 = vst.msk [vmem:[%s1 + $0x18] sm:$0x3f] %vm490, %v475
    %494 = vst.msk [vmem:[%s1 + $0x20] sm:$0xff] %vm488, %v476
    %495 = vst.msk [vmem:[%s1 + $0x28] sm:$0x3f] %vm490, %v477
    %496 = vst.msk [vmem:[%s1 + $0x30] sm:$0xff] %vm488, %v478
    %497 = vst.msk [vmem:[%s1 + $0x38] sm:$0x3f] %vm490, %v479
    %498 = vst.msk [vmem:[%s1 + $0x40] sm:$0xff] %vm488, %v480
    %499 = vst.msk [vmem:[%s1 + $0x48] sm:$0x3f] %vm490, %v481
    %500 = vst.msk [vmem:[%s1 + $0x50] sm:$0xff] %vm488, %v482
    %501 = vst.msk [vmem:[%s1 + $0x58] sm:$0x3f] %vm490, %v483
    %502 = vst.msk [vmem:[%s1 + $0x60] sm:$0xff] %vm488, %v484
    %503 = vst.msk [vmem:[%s1 + $0x68] sm:$0x3f] %vm490, %v485
    %504 = vst.msk [vmem:[%s1 + $0x70] sm:$0xff] %vm488, %v486
    %505 = vst.msk [vmem:[%s1 + $0x78] sm:$0x3f] %vm490, %v487
    // Predicated region
    $region10: #{tpu_custom_call.1} parent=1 // pred_check
      _
    $region11: #{tpu_custom_call.1} parent=1 // pred_check_branch
      %507 = sbr.rel (0) target = $region13
    $region12: #{tpu_custom_call.1} parent=1 // pred_region
      _
    $region13: #{tpu_custom_call.1} parent=1 // pred_fallthru
      _
    // Predicated region
    $region14: #{tpu_custom_call.1} parent=1 // pred_check
      _
    $region15: #{tpu_custom_call.1} parent=1 // pred_check_branch
      %509 = sbr.rel (0) target = $region17
    $region16: #{tpu_custom_call.1} parent=1 // pred_region
      _
    $region17: #{tpu_custom_call.1} parent=1 // pred_fallthru
      _
    %510 = vsyncpa [#allocation3], 1

</llo_original>
